<compile_context>
chip_gen: v6e
topology: v6e:2x2x1
jax: 0.10.0
libtpu: 0.0.40
codegen_flags: <defaults>
</compile_context>

<pallas_src>
import functools

import jax
import jax.numpy as jnp
from jax.experimental import pallas as pl
from jax.experimental.pallas import tpu as pltpu

EXPANSION = 2          # Bottleneck expansion
LANE = 128             # TPU lane width: channel dims padded to this
_EPS = 1e-5


def _round_up(v, m):
    return ((v + m - 1) // m) * m


def _cpad(c):
    return _round_up(c, LANE)


def _pick_tm(m, cap=512):
    """Row tile: >=2 blocks (feeds both v7x TensorCores), multiple of 16
    (bf16 sublane packing), capped at `cap` (512 rows ~85% HBM roofline)."""
    half = (m + 1) // 2
    tm = max(16, min(cap, _round_up(half, 16)))
    return min(tm, _round_up(m, 8))


# ----------------------------------------------------------------------------
# In-kernel helpers
# ----------------------------------------------------------------------------
def _write_stats(val, sum_ref, sq_ref, m_total, tm):
    """Per-grid-block partial sum / sum-of-squares of `val` (f32).  Ragged
    tail rows are masked only in the last grid step (pl.when-gated)."""
    def put(v):
        sum_ref[0] = jnp.sum(v, axis=0, keepdims=True)
        sq_ref[0] = jnp.sum(v * v, axis=0, keepdims=True)

    if m_total % tm != 0:
        i = pl.program_id(0)
        last = pl.num_programs(0) - 1

        @pl.when(i == last)
        def _():
            row = i * tm + jax.lax.broadcasted_iota(
                jnp.int32, (val.shape[0], 1), 0)
            put(jnp.where(row < m_total, val, 0.0))

        @pl.when(i != last)
        def _():
            put(val)
    else:
        put(val)


# ----------------------------------------------------------------------------
# Pallas kernels
# ----------------------------------------------------------------------------
def _mm_fused_kernel(*refs, prologue, residual, stats, m_total, tm):
    """out = [relu(x*scale+shift)] @ W + b [+ residual]; bf16 MXU, f32 acc.
    Optionally emits per-block partial BN stats of the (f32) output."""
    x_ref, w_ref, b_ref = refs[0], refs[1], refs[2]
    idx = 3
    if prologue:
        s_ref, t_ref = refs[idx], refs[idx + 1]
        idx += 2
    if residual:
        r_ref = refs[idx]
        idx += 1
    o_ref = refs[idx]
    idx += 1

    x = x_ref[...]
    if prologue:                                  # pre-activation BN + ReLU
        a = jnp.maximum(x.astype(jnp.float32) * s_ref[...] + t_ref[...], 0.0)
        xb = a.astype(jnp.bfloat16)
    else:
        xb = x.astype(jnp.bfloat16)
    acc = jnp.dot(xb, w_ref[...], preferred_element_type=jnp.float32)
    acc = acc + b_ref[...]
    if residual:                                  # fused residual epilogue
        acc = acc + r_ref[...].astype(jnp.float32)
    o_ref[...] = acc.astype(o_ref.dtype)
    if stats:                                     # fused BN-stat epilogue
        _write_stats(acc, refs[idx], refs[idx + 1], m_total, tm)


def _conv3x3_kernel(x_ref, w_ref, b_ref, s_ref, t_ref,
                    o_ref, sum_ref, sq_ref, *, H, W):
    """Direct 3x3 stride-1 pad-1 conv on one image, BN+ReLU prologue fused,
    per-image BN stats of the output emitted.

    The image stays flattened as (HW, C).  Three column-shifted (dj=-1,0,+1),
    column-masked, zero-row-padded bf16 copies are built once; every tap
    (di, dj) is then a row-aligned static slice of the dj copy at offset
    (1+di)*W, feeding a tight acc += dot(...) chain (no doubled buffer, no
    per-tap relayout copies, masks are (HW,1))."""
    HW = H * W
    C = x_ref.shape[-1]
    Cout = o_ref.shape[-1]

    x = x_ref[0]                                            # (HW, C)
    a = jnp.maximum(x.astype(jnp.float32) * s_ref[...] + t_ref[...], 0.0)
    ab = a.astype(jnp.bfloat16)

    col = jax.lax.broadcasted_iota(jnp.int32, (HW, 1), 0) % W
    zpad = jnp.zeros((W, C), jnp.bfloat16)                  # one image row
    zrow = jnp.zeros((1, C), jnp.bfloat16)

    # dj = 0
    ap0 = jnp.concatenate([zpad, ab, zpad], axis=0)
    # dj = +1 : value at m is a[m+1]; invalid when col == W-1
    sh_p = jnp.where(col < (W - 1),
                     jnp.concatenate([ab[1:, :], zrow], axis=0), 0)
    ap_p = jnp.concatenate([zpad, sh_p.astype(jnp.bfloat16), zpad], axis=0)
    # dj = -1 : value at m is a[m-1]; invalid when col == 0
    sh_m = jnp.where(col > 0,
                     jnp.concatenate([zrow, ab[:HW - 1, :]], axis=0), 0)
    ap_m = jnp.concatenate([zpad, sh_m.astype(jnp.bfloat16), zpad], axis=0)
    shifted = {-1: ap_m, 0: ap0, 1: ap_p}

    acc = jnp.zeros((HW, Cout), jnp.float32)
    for t in range(9):                                      # unrolled taps
        di, dj = t // 3 - 1, t % 3 - 1
        start = (1 + di) * W                                # aligned if W%8==0
        xt = shifted[dj][start:start + HW, :]
        acc = acc + jnp.dot(xt, w_ref[t], preferred_element_type=jnp.float32)

    acc = acc + b_ref[...]
    o_ref[0] = acc.astype(o_ref.dtype)
    _write_stats(acc, sum_ref, sq_ref, HW, HW)


def _stats_kernel(x_ref, sum_ref, sq_ref, *, m_total, tm):
    """One-pass per-channel partial sum / sum-of-squares (BN batch stats)."""
    _write_stats(x_ref[...].astype(jnp.float32), sum_ref, sq_ref, m_total, tm)


def _sbr_kernel(*refs, stats, m_total, tm):
    """relu(x*scale+bias); optional fused BN stats of the output."""
    x_ref, s_ref, b_ref, o_ref = refs[0], refs[1], refs[2], refs[3]
    o = jnp.maximum(x_ref[...].astype(jnp.float32) * s_ref[...] + b_ref[...],
                    0.0)
    o_ref[...] = o.astype(o_ref.dtype)
    if stats:
        _write_stats(o, refs[4], refs[5], m_total, tm)


# ----------------------------------------------------------------------------
# Pallas wrappers
# ----------------------------------------------------------------------------
@functools.partial(jax.jit, static_argnames=("want_stats",))
def _fused_matmul(x, w, b, scale=None, sbias=None, residual=None,
                  want_stats=False):
    """(M, K) @ (K, N) + b with optional BN+ReLU prologue, residual epilogue
    and fused BN-statistic outputs.  Output stored as bf16."""
    M, K = x.shape
    N = w.shape[1]
    tm = _pick_tm(M)
    grid_m = pl.cdiv(M, tm)
    prologue = scale is not None
    res = residual is not None

    in_specs = [pl.BlockSpec((tm, K), lambda i: (i, 0)),
                pl.BlockSpec((K, N), lambda i: (0, 0)),
                pl.BlockSpec((1, N), lambda i: (0, 0))]
    args = [x, w, b.reshape(1, N)]
    if prologue:
        in_specs += [pl.BlockSpec((1, K), lambda i: (0, 0)),
                     pl.BlockSpec((1, K), lambda i: (0, 0))]
        args += [scale.reshape(1, K), sbias.reshape(1, K)]
    if res:
        in_specs.append(pl.BlockSpec((tm, N), lambda i: (i, 0)))
        args.append(residual)

    if want_stats:
        out_shape = (jax.ShapeDtypeStruct((M, N), jnp.bfloat16),
                     jax.ShapeDtypeStruct((grid_m, 1, N), jnp.float32),
                     jax.ShapeDtypeStruct((grid_m, 1, N), jnp.float32))
        out_specs = (pl.BlockSpec((tm, N), lambda i: (i, 0)),
                     pl.BlockSpec((1, 1, N), lambda i: (i, 0, 0)),
                     pl.BlockSpec((1, 1, N), lambda i: (i, 0, 0)))
    else:
        out_shape = jax.ShapeDtypeStruct((M, N), jnp.bfloat16)
        out_specs = pl.BlockSpec((tm, N), lambda i: (i, 0))

    outs = pl.pallas_call(
        functools.partial(_mm_fused_kernel, prologue=prologue, residual=res,
                          stats=want_stats, m_total=M, tm=tm),
        out_shape=out_shape,
        grid=(grid_m,),
        in_specs=in_specs,
        out_specs=out_specs,
        compiler_params=pltpu.CompilerParams(
            dimension_semantics=("parallel",)),
    )(*args)

    if want_stats:
        y, ps, pq = outs
        return y, (jnp.sum(ps, axis=(0, 1)), jnp.sum(pq, axis=(0, 1)))
    return outs


@functools.partial(jax.jit, static_argnames=("H", "W"))
def _conv3x3(x, w, b, scale, sbias, *, H, W):
    """x: (N, H*W, C) bf16, w: (9, C, Cout) bf16 -> (N, H*W, Cout) bf16 plus
    fused BN statistics of the output."""
    N, HW, C = x.shape
    Cout = w.shape[-1]
    est = 16 * HW * max(C, Cout) * 4 + (1 << 20)     # rough per-image peak
    vmem_bytes = int(min(64 * 1024 * 1024, max(32 * 1024 * 1024, est)))

    y, ps, pq = pl.pallas_call(
        functools.partial(_conv3x3_kernel, H=H, W=W),
        out_shape=(jax.ShapeDtypeStruct((N, HW, Cout), jnp.bfloat16),
                   jax.ShapeDtypeStruct((N, 1, Cout), jnp.float32),
                   jax.ShapeDtypeStruct((N, 1, Cout), jnp.float32)),
        grid=(N,),
        in_specs=[
            pl.BlockSpec((1, HW, C), lambda n: (n, 0, 0)),
            pl.BlockSpec((9, C, Cout), lambda n: (0, 0, 0)),
            pl.BlockSpec((1, Cout), lambda n: (0, 0)),
            pl.BlockSpec((1, C), lambda n: (0, 0)),
            pl.BlockSpec((1, C), lambda n: (0, 0)),
        ],
        out_specs=(pl.BlockSpec((1, HW, Cout), lambda n: (n, 0, 0)),
                   pl.BlockSpec((1, 1, Cout), lambda n: (n, 0, 0)),
                   pl.BlockSpec((1, 1, Cout), lambda n: (n, 0, 0))),
        compiler_params=pltpu.CompilerParams(
            dimension_semantics=("parallel",),
            vmem_limit_bytes=vmem_bytes),
    )(x, w, b.reshape(1, Cout), scale.reshape(1, C), sbias.reshape(1, C))
    return y, (jnp.sum(ps, axis=(0, 1)), jnp.sum(pq, axis=(0, 1)))


@jax.jit
def _stats(x):
    """Per-channel (sum, sum_sq) over rows of (M, C); per-block partials
    written in parallel (both v7x cores), reduced in XLA."""
    M, C = x.shape
    tm = _pick_tm(M, cap=1024)
    g = pl.cdiv(M, tm)
    ps, pq = pl.pallas_call(
        functools.partial(_stats_kernel, m_total=M, tm=tm),
        out_shape=(jax.ShapeDtypeStruct((g, 1, C), jnp.float32),
                   jax.ShapeDtypeStruct((g, 1, C), jnp.float32)),
        grid=(g,),
        in_specs=[pl.BlockSpec((tm, C), lambda i: (i, 0))],
        out_specs=(pl.BlockSpec((1, 1, C), lambda i: (i, 0, 0)),
                   pl.BlockSpec((1, 1, C), lambda i: (i, 0, 0))),
        compiler_params=pltpu.CompilerParams(
            dimension_semantics=("parallel",)),
    )(x)
    return jnp.sum(ps, axis=(0, 1)), jnp.sum(pq, axis=(0, 1))


@functools.partial(jax.jit, static_argnames=("want_stats",))
def _sbr(x, scale, bias, want_stats=False):
    """relu(x * scale + bias), per-channel; bf16 output, optional stats."""
    M, C = x.shape
    tm = _pick_tm(M)
    g = pl.cdiv(M, tm)
    if want_stats:
        out_shape = (jax.ShapeDtypeStruct((M, C), jnp.bfloat16),
                     jax.ShapeDtypeStruct((g, 1, C), jnp.float32),
                     jax.ShapeDtypeStruct((g, 1, C), jnp.float32))
        out_specs = (pl.BlockSpec((tm, C), lambda i: (i, 0)),
                     pl.BlockSpec((1, 1, C), lambda i: (i, 0, 0)),
                     pl.BlockSpec((1, 1, C), lambda i: (i, 0, 0)))
    else:
        out_shape = jax.ShapeDtypeStruct((M, C), jnp.bfloat16)
        out_specs = pl.BlockSpec((tm, C), lambda i: (i, 0))

    outs = pl.pallas_call(
        functools.partial(_sbr_kernel, stats=want_stats, m_total=M, tm=tm),
        out_shape=out_shape,
        grid=(g,),
        in_specs=[pl.BlockSpec((tm, C), lambda i: (i, 0)),
                  pl.BlockSpec((1, C), lambda i: (0, 0)),
                  pl.BlockSpec((1, C), lambda i: (0, 0))],
        out_specs=out_specs,
        compiler_params=pltpu.CompilerParams(
            dimension_semantics=("parallel",)),
    )(x, scale.reshape(1, C), bias.reshape(1, C))

    if want_stats:
        y, ps, pq = outs
        return y, (jnp.sum(ps, axis=(0, 1)), jnp.sum(pq, axis=(0, 1)))
    return outs


# ----------------------------------------------------------------------------
# Layer helpers
# ----------------------------------------------------------------------------
def _fold_bn(stats, m, bn):
    """Fold training-mode BN (batch stats, biased var) into (scale, bias)."""
    s, sq = stats
    mean = s / m
    var = jnp.maximum(sq / m - mean * mean, 0.0)
    scale = bn["g"] * jax.lax.rsqrt(var + _EPS)
    bias = bn["b"] - mean * scale
    return scale, bias


def conv1x1(x, p, residual=None, want_stats=False):
    n, h, w, c = x.shape
    r = residual.reshape(n * h * w, -1) if residual is not None else None
    out = _fused_matmul(x.reshape(-1, c), p["w"], p["b"], residual=r,
                        want_stats=want_stats)
    if want_stats:
        y, st = out
        return y.reshape(n, h, w, -1), st
    return out.reshape(n, h, w, -1)


def apply_bn_relu(x, bn, stats=None, want_stats=False):
    n, h, w, c = x.shape
    x2 = x.reshape(-1, c)
    m = x2.shape[0]
    st = stats if stats is not None else _stats(x2)
    s, b = _fold_bn(st, m, bn)
    out = _sbr(x2, s, b, want_stats=want_stats)
    if want_stats:
        y2, yst = out
        return y2.reshape(n, h, w, c), yst
    return out.reshape(n, h, w, c)


def stem_conv(x, p):
    """7x7 stride-2 pad-3 stem conv (the only strided conv in the network)."""
    # TODO(synk): stem keeps an XLA im2col (single use); K padded 147 -> 256.
    N, H, W, C = x.shape
    kh = kw = 7
    s, pad = 2, 3
    Ho = (H + 2 * pad - kh) // s + 1
    Wo = (W + 2 * pad - kw) // s + 1
    xp = jnp.pad(x, ((0, 0), (pad, pad), (pad, pad), (0, 0)))
    cols = [xp[:, i:i + s * Ho:s, j:j + s * Wo:s, :]
            for i in range(kh) for j in range(kw)]
    xc = jnp.concatenate(cols, axis=-1).reshape(N * Ho * Wo, kh * kw * C)
    kp = p["w"].shape[0]
    if kp > xc.shape[1]:
        xc = jnp.pad(xc, ((0, 0), (0, kp - xc.shape[1])))
    y, st = _fused_matmul(xc.astype(jnp.bfloat16), p["w"], p["b"],
                          want_stats=True)
    return y.reshape(N, Ho, Wo, -1), st


def maxpool2(x):
    n, h, w, c = x.shape
    return x.reshape(n, h // 2, 2, w // 2, 2, c).max(axis=(2, 4))


def upsample2(x):  # F.interpolate(scale_factor=2), default mode='nearest'
    return jnp.repeat(jnp.repeat(x, 2, axis=1), 2, axis=2)


def bottleneck_fwd(p, x, stats=None):
    """Pre-activation Bottleneck, fully fused into 3 (or 4) Pallas conv calls.
    BN stats for bn2/bn3 (and the next block's bn1) come out of the producing
    kernels; `stats` carries the stats of `x` when the producer provided them.
    Returns (y, stats_of_y)."""
    n, h, w, c = x.shape
    x2 = x.reshape(-1, c)
    m = x2.shape[0]

    st1 = stats if stats is not None else _stats(x2)
    s1, b1 = _fold_bn(st1, m, p["bn1"])
    out1, st2 = _fused_matmul(x2, p["conv1"]["w"], p["conv1"]["b"],
                              scale=s1, sbias=b1, want_stats=True)

    s2, b2 = _fold_bn(st2, m, p["bn2"])
    out2, st3 = _conv3x3(out1.reshape(n, h * w, -1), p["conv2"]["w"],
                         p["conv2"]["b"], s2, b2, H=h, W=w)
    out2 = out2.reshape(m, -1)

    s3, b3 = _fold_bn(st3, m, p["bn3"])
    if p["downsample"] is not None:
        residual = _fused_matmul(x2, p["downsample"]["w"],
                                 p["downsample"]["b"])
    else:
        residual = x2
    out3, st_out = _fused_matmul(out2, p["conv3"]["w"], p["conv3"]["b"],
                                 scale=s3, sbias=b3, residual=residual,
                                 want_stats=True)
    return out3.reshape(n, h, w, -1), st_out


def residual_seq_fwd(blocks, x, stats=None):
    for blk in blocks:
        x, stats = bottleneck_fwd(blk, x, stats)
    return x, stats


# ----------------------------------------------------------------------------
# Parameter initialization (deterministic, synthetic; padded channel entries
# of every weight / bias / gamma / beta are zero)
# ----------------------------------------------------------------------------
class KeyGen:
    def __init__(self, key):
        self.key = key

    def __call__(self):
        self.key, k = jax.random.split(self.key)
        return k


def init_conv1x1(kg, cin, cout):
    cin_p, cout_p = _cpad(cin), _cpad(cout)
    w = jnp.zeros((cin_p, cout_p), jnp.float32)
    w = w.at[:cin, :cout].set(
        jax.random.normal(kg(), (cin, cout), jnp.float32) * 0.05)
    b = jnp.zeros((cout_p,), jnp.float32)
    b = b.at[:cout].set(jax.random.normal(kg(), (cout,), jnp.float32) * 0.05)
    return {"w": w.astype(jnp.bfloat16), "b": b}


def init_conv3x3(kg, cin, cout):
    cin_p, cout_p = _cpad(cin), _cpad(cout)
    w = jnp.zeros((3, 3, cin_p, cout_p), jnp.float32)
    w = w.at[:, :, :cin, :cout].set(
        jax.random.normal(kg(), (3, 3, cin, cout), jnp.float32) * 0.05)
    b = jnp.zeros((cout_p,), jnp.float32)
    b = b.at[:cout].set(jax.random.normal(kg(), (cout,), jnp.float32) * 0.05)
    return {"w": w.reshape(9, cin_p, cout_p).astype(jnp.bfloat16), "b": b}


def init_conv7x7(kg, cin, cout):
    cout_p = _cpad(cout)
    k = 49 * cin
    kp = _round_up(k, LANE)          # lane/MXU aligned K panel (147 -> 256)
    w = jnp.zeros((kp, cout_p), jnp.float32)
    w = w.at[:k, :cout].set(
        jax.random.normal(kg(), (7, 7, cin, cout), jnp.float32)
        .reshape(k, cout) * 0.05)
    b = jnp.zeros((cout_p,), jnp.float32)
    b = b.at[:cout].set(jax.random.normal(kg(), (cout,), jnp.float32) * 0.05)
    return {"w": w.astype(jnp.bfloat16), "b": b}


def init_bn(c):
    cp = _cpad(c)
    g = jnp.zeros((cp,), jnp.float32).at[:c].set(1.0)  # padded gamma = 0
    return {"g": g, "b": jnp.zeros((cp,), jnp.float32)}


def init_bottleneck(kg, inplanes, planes=None, downsample=False):
    planes = planes if planes is not None else inplanes // EXPANSION
    return {
        "bn1": init_bn(inplanes),
        "conv1": init_conv1x1(kg, inplanes, planes),
        "bn2": init_bn(planes),
        "conv2": init_conv3x3(kg, planes, planes),
        "bn3": init_bn(planes),
        "conv3": init_conv1x1(kg, planes, planes * EXPANSION),
        "downsample": (init_conv1x1(kg, inplanes, planes * EXPANSION)
                       if downsample else None),
    }


def init_residual_seq(kg, num_blocks, inplanes, planes=None):
    """HourglassNet._make_residual (stride is always 1 in this network)."""
    planes = planes if planes is not None else inplanes // EXPANSION
    need_ds = inplanes != planes * EXPANSION
    blocks = [init_bottleneck(kg, inplanes, planes, need_ds)]
    inp = planes * EXPANSION
    for _ in range(1, num_blocks):
        blocks.append(init_bottleneck(kg, inp, planes))
    return blocks


def init_hg_residual(kg, num_blocks, inplanes):
    """Hourglass._make_residual: block(inplanes) with all defaults."""
    return [init_bottleneck(kg, inplanes) for _ in range(num_blocks)]


def init_hourglass(kg, num_blocks, inplanes, depth):
    encoders = []
    for i in range(depth):
        res = [init_hg_residual(kg, num_blocks, inplanes) for _ in range(2)]
        if i == depth - 1:
            res.append(init_hg_residual(kg, num_blocks, inplanes))
        encoders.append(res)
    decoders = [init_hg_residual(kg, num_blocks, inplanes)
                for _ in range(depth)]
    return {"depth": depth, "enc": encoders, "dec": decoders}


def hourglass_fwd(p, x, stats=None):
    depth = p["depth"]
    skips = []
    cur, cst = x, stats
    for i in range(depth):
        skips.append(residual_seq_fwd(p["enc"][i][0], cur, cst))
        cur, cst = residual_seq_fwd(p["enc"][i][1], maxpool2(cur), None)
        if i == depth - 1:
            skips.append(residual_seq_fwd(p["enc"][i][2], cur, cst))
    skips = skips[::-1]
    out, ost = skips[0]
    for i in range(depth):
        up, _ = skips[i + 1]
        low, _ = residual_seq_fwd(p["dec"][i], out, ost)
        out = upsample2(low) + up
        ost = None
    return out, None


def init_hourglass_net(kg, in_channels, inplanes, num_feats, depth,
                       num_stacks, num_blocks, num_classes):
    params = {"num_stacks": num_stacks, "num_classes": num_classes,
              "num_feats": num_feats}
    params["shallow_conv"] = {"conv": init_conv7x7(kg, in_channels, inplanes),
                              "bn": init_bn(inplanes)}
    params["shallow_res"] = [
        init_residual_seq(kg, 1, inplanes, inplanes),
        init_residual_seq(kg, 1, inplanes * EXPANSION, inplanes * EXPANSION),
        init_residual_seq(kg, 1, inplanes * EXPANSION ** 2,
                          num_feats // EXPANSION),
    ]
    params["hgs"] = [init_hourglass(kg, num_blocks, num_feats, depth)
                     for _ in range(num_stacks)]
    params["res"] = [init_residual_seq(kg, num_blocks, num_feats)
                     for _ in range(num_stacks)]
    params["fcs"] = [{"conv": init_conv1x1(kg, num_feats, num_feats),
                      "bn": init_bn(num_feats)} for _ in range(num_stacks)]
    params["scores"] = [init_conv1x1(kg, num_feats, num_classes)
                        for _ in range(num_stacks)]        # head_block = 1x1
    params["fcs_"] = [init_conv1x1(kg, num_feats, num_feats)
                      for _ in range(num_stacks - 1)]
    params["scores_"] = [init_conv1x1(kg, num_classes, num_feats)
                         for _ in range(num_stacks - 1)]
    return params


def fc_fwd(p, x):
    n, h, w, c = x.shape
    x2 = x.reshape(-1, c)
    y2, st = _fused_matmul(x2, p["conv"]["w"], p["conv"]["b"],
                           want_stats=True)
    s, b = _fold_bn(st, y2.shape[0], p["bn"])
    y2 = _sbr(y2, s, b)
    return y2.reshape(n, h, w, -1)


def hourglass_net_fwd(params, x_nchw):
    x = jnp.transpose(x_nchw, (0, 2, 3, 1))                # NCHW -> NHWC
    x, st = stem_conv(x, params["shallow_conv"]["conv"])
    x, st = apply_bn_relu(x, params["shallow_conv"]["bn"], stats=st,
                          want_stats=True)
    # shallow_res: res, maxpool, res, res
    x, st = residual_seq_fwd(params["shallow_res"][0], x, st)
    x = maxpool2(x)
    x, st = residual_seq_fwd(params["shallow_res"][1], x, None)
    x, st = residual_seq_fwd(params["shallow_res"][2], x, st)

    outs = []
    for i in range(params["num_stacks"]):
        y, yst = hourglass_fwd(params["hgs"][i], x, st)
        y, yst = residual_seq_fwd(params["res"][i], y, yst)
        y = fc_fwd(params["fcs"][i], y)
        score = conv1x1(y, params["scores"][i])
        outs.append(score)
        if i < params["num_stacks"] - 1:
            # x_new = x + fcs_(y) + scores_(score), both adds fused as
            # residual epilogues of the two 1x1 convs (no XLA adds).
            t = conv1x1(y, params["fcs_"][i], residual=x)
            x, st = conv1x1(score, params["scores_"][i], residual=t,
                            want_stats=True)

    nc, nf = params["num_classes"], params["num_feats"]
    outs_nchw = [jnp.transpose(o[..., :nc], (0, 3, 1, 2)).astype(jnp.float32)
                 for o in outs[::-1]]
    y_nchw = jnp.transpose(y[..., :nf], (0, 3, 1, 2)).astype(jnp.float32)
    return outs_nchw, y_nchw


# ----------------------------------------------------------------------------
if __name__ == "__main__":
    root = jax.random.PRNGKey(0)
    k_params, k_input = jax.random.split(root)

    in_channels, inplanes, num_feats = 3, 4, 8
    depth, num_stacks, num_blocks, num_classes = 2, 2, 1, 3

    kg = KeyGen(k_params)
    params = init_hourglass_net(kg, in_channels, inplanes, num_feats,
                                depth, num_stacks, num_blocks, num_classes)

    x = jax.random.normal(k_input, (2, in_channels, 32, 32), jnp.float32)

    outs, y = hourglass_net_fwd(params, x)
    jax.block_until_ready(outs)
    jax.block_until_ready(y)

    # sanity: scores are at 1/4 input resolution, values finite
    assert all(o.shape == (2, num_classes, 8, 8) for o in outs)
    assert y.shape == (2, num_feats, 8, 8)
    assert bool(jnp.isfinite(y).all())
    assert all(bool(jnp.isfinite(o).all()) for o in outs)
    print("KERNEL_OK")
</pallas_src>

<mosaic_0001>
module attributes {stable_mosaic.version = 11 : i64} {
  func.func @_mm_fused_kernel(%arg0: i32, %arg1: memref<256x256xbf16, #tpu.memory_space<vmem>>, %arg2: memref<256x128xbf16, #tpu.memory_space<vmem>>, %arg3: memref<1x128xf32, #tpu.memory_space<vmem>>, %arg4: memref<256x128xbf16, #tpu.memory_space<vmem>>, %arg5: memref<1x1x128xf32, #tpu.memory_space<vmem>>, %arg6: memref<1x1x128xf32, #tpu.memory_space<vmem>>) attributes {dimension_semantics = [#tpu.dimension_semantics<parallel>], iteration_bounds = array<i64: 2>, scalar_prefetch = 0 : i64, scratch_operands = 0 : i64, tpu.core_type = #tpu.core_type<tc>, window_params = [{transform_indices = @transform_0, window_bounds = array<i64: 256, 256>}, {pipeline_mode = #tpu.pipeline_mode<synchronous>, transform_indices = @transform_1, window_bounds = array<i64: 256, 128>}, {pipeline_mode = #tpu.pipeline_mode<synchronous>, transform_indices = @transform_2, window_bounds = array<i64: 1, 128>}, {transform_indices = @transform_3, window_bounds = array<i64: 256, 128>}, {transform_indices = @transform_4, window_bounds = array<i64: 1, 1, 128>}, {transform_indices = @transform_5, window_bounds = array<i64: 1, 1, 128>}]} {
    %c0 = arith.constant 0 : index
    %c0_0 = arith.constant 0 : index
    %0 = vector.load %arg1[%c0, %c0_0] : memref<256x256xbf16, #tpu.memory_space<vmem>>, vector<256x256xbf16>
    %c0_1 = arith.constant 0 : index
    %c0_2 = arith.constant 0 : index
    %1 = vector.load %arg2[%c0_1, %c0_2] : memref<256x128xbf16, #tpu.memory_space<vmem>>, vector<256x128xbf16>
    %cst = arith.constant dense<0.000000e+00> : vector<256x128xf32>
    %2 = tpu.matmul %0, %1, %cst {dimension_numbers = #tpu.dot_dimension_numbers<[1], [0], [0], [1], [0, 0, 1, 1], [], []>} : vector<256x256xbf16>, vector<256x128xbf16>, vector<256x128xf32> -> vector<256x128xf32>
    %c0_3 = arith.constant 0 : index
    %c0_4 = arith.constant 0 : index
    %3 = vector.load %arg3[%c0_3, %c0_4] : memref<1x128xf32, #tpu.memory_space<vmem>>, vector<1x128xf32>
    %4 = vector.broadcast %3 : vector<1x128xf32> to vector<256x128xf32>
    %5 = arith.addf %2, %4 : vector<256x128xf32>
    %6 = arith.truncf %5 : vector<256x128xf32> to vector<256x128xbf16>
    %c0_5 = arith.constant 0 : index
    %c0_6 = arith.constant 0 : index
    %7 = vector.load %arg4[%c0_5, %c0_6] : memref<256x128xbf16, #tpu.memory_space<vmem>>, vector<256x128xbf16>
    tpu.vector_store %arg4[%c0_5, %c0_6], %6 {strides = array<i32>} : memref<256x128xbf16, #tpu.memory_space<vmem>>, vector<256x128xbf16>,
    %cst_7 = arith.constant dense<0.000000e+00> : vector<128xf32>
    %8 = vector.multi_reduction <add>, %5, %cst_7 [0] : vector<256x128xf32> to vector<128xf32>
    %9 = vector.shape_cast %8 : vector<128xf32> to vector<1x128xf32>
    %c0_8 = arith.constant 0 : index
    %c0_9 = arith.constant 0 : index
    %c0_10 = arith.constant 0 : index
    %10 = vector.load %arg5[%c0_8, %c0_9, %c0_10] : memref<1x1x128xf32, #tpu.memory_space<vmem>>, vector<1x1x128xf32>
    %11 = vector.shape_cast %10 : vector<1x1x128xf32> to vector<1x128xf32>
    %12 = vector.shape_cast %9 : vector<1x128xf32> to vector<1x1x128xf32>
    tpu.vector_store %arg5[%c0_8, %c0_9, %c0_10], %12 {strides = array<i32>} : memref<1x1x128xf32, #tpu.memory_space<vmem>>, vector<1x1x128xf32>,
    %13 = arith.mulf %5, %5 : vector<256x128xf32>
    %cst_11 = arith.constant dense<0.000000e+00> : vector<128xf32>
    %14 = vector.multi_reduction <add>, %13, %cst_11 [0] : vector<256x128xf32> to vector<128xf32>
    %15 = vector.shape_cast %14 : vector<128xf32> to vector<1x128xf32>
    %c0_12 = arith.constant 0 : index
    %c0_13 = arith.constant 0 : index
    %c0_14 = arith.constant 0 : index
    %16 = vector.load %arg6[%c0_12, %c0_13, %c0_14] : memref<1x1x128xf32, #tpu.memory_space<vmem>>, vector<1x1x128xf32>
    %17 = vector.shape_cast %16 : vector<1x1x128xf32> to vector<1x128xf32>
    %18 = vector.shape_cast %15 : vector<1x128xf32> to vector<1x1x128xf32>
    tpu.vector_store %arg6[%c0_12, %c0_13, %c0_14], %18 {strides = array<i32>} : memref<1x1x128xf32, #tpu.memory_space<vmem>>, vector<1x1x128xf32>,
    return
  }
  func.func @transform_0(%arg0: i32) -> (i32, i32) {
    %c0_i32 = arith.constant 0 : i32
    %c0_i32_0 = arith.constant 0 : i32
    return %arg0, %c0_i32 : i32, i32
  }
  func.func @transform_1(%arg0: i32) -> (i32, i32) {
    %c0_i32 = arith.constant 0 : i32
    %c0_i32_0 = arith.constant 0 : i32
    %c0_i32_1 = arith.constant 0 : i32
    return %c0_i32, %c0_i32_0 : i32, i32
  }
  func.func @transform_2(%arg0: i32) -> (i32, i32) {
    %c0_i32 = arith.constant 0 : i32
    %c0_i32_0 = arith.constant 0 : i32
    %c0_i32_1 = arith.constant 0 : i32
    return %c0_i32, %c0_i32_0 : i32, i32
  }
  func.func @transform_3(%arg0: i32) -> (i32, i32) {
    %c0_i32 = arith.constant 0 : i32
    %c0_i32_0 = arith.constant 0 : i32
    return %arg0, %c0_i32 : i32, i32
  }
  func.func @transform_4(%arg0: i32) -> (i32, i32, i32) {
    %c0_i32 = arith.constant 0 : i32
    %c0_i32_0 = arith.constant 0 : i32
    %c0_i32_1 = arith.constant 0 : i32
    return %arg0, %c0_i32, %c0_i32_0 : i32, i32, i32
  }
  func.func @transform_5(%arg0: i32) -> (i32, i32, i32) {
    %c0_i32 = arith.constant 0 : i32
    %c0_i32_0 = arith.constant 0 : i32
    %c0_i32_1 = arith.constant 0 : i32
    return %arg0, %c0_i32, %c0_i32_0 : i32, i32, i32
  }
}

</mosaic_0001>

<llo_original>
// kernel: _fused_matmul.1
$region0: #{_fused_matmul.1}
  #allocation0 [shape = 'u32[]', space=smem, size = 0x4, offset = 0x4, fixed_abs, tag = 'smem constant byte address 0x4 - core index']
  #allocation1 [shape = 'u32[144,128]{1,0:T(1,128)}', space=vmem, size = 0x12000, scoped, tag = 'internal scratch']
  %s0 = inlined_call_operand.hbm [shape: bf16[512,256], index: 0, kind: input, shape index: {}]
  %s1 = inlined_call_operand.hbm [shape: bf16[256,128], index: 1, kind: input, shape index: {}]
  %s2 = inlined_call_operand.vmem [shape: f32[1,128], index: 2, kind: input, shape index: {}]
  %s3 = inlined_call_operand.hbm [shape: bf16[512,128], index: 3, kind: output, shape index: {0}]
  %s4 = inlined_call_operand.vmem [shape: f32[2,1,128], index: 4, kind: output, shape index: {1}]
  %s5 = inlined_call_operand.vmem [shape: f32[2,1,128], index: 5, kind: output, shape index: {2}]
  %6 = xla_tuple %s3, %s4, %s5
  %s7 = sld [smem:[#allocation0]]
  $region69: #{_fused_matmul.1} parent=0
    _
  %s9 = ssub.s32 1, %s7
  %s10 = scalar_select 0, %s9, %s7
  $region1: #{_fused_matmul.1} parent=0
    #allocation2 [shape = 'u8[262144]{0}', space=vmem, size = 0x40000, scoped, tag = 'input window, operand 0']
    #allocation3 [shape = 's32[2]{0}', space=sflag, size = 0x8, scoped, tag = 'scoped memory for _fused_matmul.1']
    #allocation4 [shape = 's32[2]{0}', space=sflag, size = 0x8, scoped, tag = 'scoped memory for _fused_matmul.1']
    #allocation5 [shape = 'u8[65536]{0}', space=vmem, size = 0x10000, scoped, tag = 'input window, operand 1, single buffered']
    #allocation6 [shape = 's32[1]{0}', space=sflag, size = 0x4, scoped, tag = 'scoped memory for _fused_matmul.1']
    #allocation7 [shape = 'u8[131072]{0}', space=vmem, size = 0x20000, scoped, tag = 'output window, operand 0']
    %11 = vsyncpa [#allocation3], 0
    %s12 = scalar_lea.sflag [#allocation3], 1
    %13 = vsyncpa %s12, 0
    %14 = vsyncpa [#allocation6], 0
    %15 = vsyncpa [#allocation4], 0
    %s16 = scalar_lea.sflag [#allocation4], 1
    %17 = vsyncpa %s16, 0
    loop: start=0, step=1, limit=4
    $region2: #{_fused_matmul.1} parent=1 // loop_pre_header
      _
    $region3: #{_fused_matmul.1} parent=1 // loop_header
      %s19 = sphi 0, %s23
      %p20 = scmp.ge.s32.totalorder %s19, 4
      %s29 = sphi 0, %s31
      %s32 = sphi 0, %s29
      %s33 = sphi 0, %s32
      %s49 = sphi 0, %s33
      %s53 = sphi 0, %s53
      %s55 = sphi 0, %s53
      %s56 = sphi 0, %s55
      %s70 = sphi 0, %s56
      %s74 = sphi 0, %s74
      %s76 = sphi 0, %s74
      %s77 = sphi 0, %s76
      %s91 = sphi 0, %s77
      %s97 = sphi 0, %s99
      %s100 = sphi 0, %s97
      %s101 = sphi 0, %s100
      %s117 = sphi 0, %s101
      %s123 = sphi 0, %s125
      %s126 = sphi 0, %s123
      %s127 = sphi 0, %s126
      %s143 = sphi 0, %s127
      %s149 = sphi 0, %s151
      %s152 = sphi 0, %s149
      %s153 = sphi 0, %s152
      %s169 = sphi 0, %s153
    $region4: #{_fused_matmul.1} parent=1 // loop_header_branch
      %22 = sbr.rel (%p20) target = $region8
    $region5: #{_fused_matmul.1} parent=1 // loop_body
      %s24 = ssub.s32 %s19, 1
      %s25 = ssub.s32 %s19, 2
      %s26 = sadd.s32 %s19, 1
      %s27 = ssub.s32 %s19, %s26
      %p28 = scmp.eq.s32.totalorder %s27, 0
      %s30 = sadd.s32 %s29, 1
      %s31 = scalar_select %p28, %s29, %s30
      %p34 = pneg %p28
      %p35 = scmp.eq.s32.totalorder %s19, 1
      %p36 = por %p34, %p35
      %p37 = scmp.ne.s32.totalorder %s29, %s32
      %p38 = scmp.eq.s32.totalorder %s19, 0
      %p39 = por %p37, %p38
      %p40 = scmp.ne.s32.totalorder %s29, %s32
      %p41 = scmp.eq.s32.totalorder %s24, 1
      %p42 = por %p40, %p41
      %p43 = scmp.ne.s32.totalorder %s32, %s33
      %p44 = scmp.eq.s32.totalorder %s24, 0
      %p45 = por %p43, %p44
      %p46 = scmp.ne.s32.totalorder %s32, %s33
      %p47 = scmp.eq.s32.totalorder %s25, 1
      %p48 = por %p46, %p47
      %p50 = scmp.ne.s32.totalorder %s33, %s49
      %p51 = scmp.eq.s32.totalorder %s25, 0
      %p52 = por %p50, %p51
      %s54 = sadd.s32 %s53, 1
      %p57 = scmp.eq.s32.totalorder %s19, 1
      %p58 = scmp.ne.s32.totalorder %s53, %s55
      %p59 = scmp.eq.s32.totalorder %s19, 0
      %p60 = por %p58, %p59
      %p61 = scmp.ne.s32.totalorder %s53, %s55
      %p62 = scmp.eq.s32.totalorder %s24, 1
      %p63 = por %p61, %p62
      %p64 = scmp.ne.s32.totalorder %s55, %s56
      %p65 = scmp.eq.s32.totalorder %s24, 0
      %p66 = por %p64, %p65
      %p67 = scmp.ne.s32.totalorder %s55, %s56
      %p68 = scmp.eq.s32.totalorder %s25, 1
      %p69 = por %p67, %p68
      %p71 = scmp.ne.s32.totalorder %s56, %s70
      %p72 = scmp.eq.s32.totalorder %s25, 0
      %p73 = por %p71, %p72
      %s75 = sadd.s32 %s74, 1
      %p78 = scmp.eq.s32.totalorder %s19, 1
      %p79 = scmp.ne.s32.totalorder %s74, %s76
      %p80 = scmp.eq.s32.totalorder %s19, 0
      %p81 = por %p79, %p80
      %p82 = scmp.ne.s32.totalorder %s74, %s76
      %p83 = scmp.eq.s32.totalorder %s24, 1
      %p84 = por %p82, %p83
      %p85 = scmp.ne.s32.totalorder %s76, %s77
      %p86 = scmp.eq.s32.totalorder %s24, 0
      %p87 = por %p85, %p86
      %p88 = scmp.ne.s32.totalorder %s76, %s77
      %p89 = scmp.eq.s32.totalorder %s25, 1
      %p90 = por %p88, %p89
      %p92 = scmp.ne.s32.totalorder %s77, %s91
      %p93 = scmp.eq.s32.totalorder %s25, 0
      %p94 = por %p92, %p93
      %s95 = ssub.s32 %s19, %s26
      %p96 = scmp.eq.s32.totalorder %s95, 0
      %s98 = sadd.s32 %s97, 1
      %s99 = scalar_select %p96, %s97, %s98
      %p102 = pneg %p96
      %p103 = scmp.eq.s32.totalorder %s19, 1
      %p104 = por %p102, %p103
      %p105 = scmp.ne.s32.totalorder %s97, %s100
      %p106 = scmp.eq.s32.totalorder %s19, 0
      %p107 = por %p105, %p106
      %p108 = scmp.ne.s32.totalorder %s97, %s100
      %p109 = scmp.eq.s32.totalorder %s24, 1
      %p110 = por %p108, %p109
      %p111 = scmp.ne.s32.totalorder %s100, %s101
      %p112 = scmp.eq.s32.totalorder %s24, 0
      %p113 = por %p111, %p112
      %p114 = scmp.ne.s32.totalorder %s100, %s101
      %p115 = scmp.eq.s32.totalorder %s25, 1
      %p116 = por %p114, %p115
      %p118 = scmp.ne.s32.totalorder %s101, %s117
      %p119 = scmp.eq.s32.totalorder %s25, 0
      %p120 = por %p118, %p119
      %s121 = ssub.s32 %s19, %s26
      %p122 = scmp.eq.s32.totalorder %s121, 0
      %s124 = sadd.s32 %s123, 1
      %s125 = scalar_select %p122, %s123, %s124
      %p128 = pneg %p122
      %p129 = scmp.eq.s32.totalorder %s19, 1
      %p130 = por %p128, %p129
      %p131 = scmp.ne.s32.totalorder %s123, %s126
      %p132 = scmp.eq.s32.totalorder %s19, 0
      %p133 = por %p131, %p132
      %p134 = scmp.ne.s32.totalorder %s123, %s126
      %p135 = scmp.eq.s32.totalorder %s24, 1
      %p136 = por %p134, %p135
      %p137 = scmp.ne.s32.totalorder %s126, %s127
      %p138 = scmp.eq.s32.totalorder %s24, 0
      %p139 = por %p137, %p138
      %p140 = scmp.ne.s32.totalorder %s126, %s127
      %p141 = scmp.eq.s32.totalorder %s25, 1
      %p142 = por %p140, %p141
      %p144 = scmp.ne.s32.totalorder %s127, %s143
      %p145 = scmp.eq.s32.totalorder %s25, 0
      %p146 = por %p144, %p145
      %s147 = ssub.s32 %s19, %s26
      %p148 = scmp.eq.s32.totalorder %s147, 0
      %s150 = sadd.s32 %s149, 1
      %s151 = scalar_select %p148, %s149, %s150
      %p154 = pneg %p148
      %p155 = scmp.eq.s32.totalorder %s19, 1
      %p156 = por %p154, %p155
      %p157 = scmp.ne.s32.totalorder %s149, %s152
      %p158 = scmp.eq.s32.totalorder %s19, 0
      %p159 = por %p157, %p158
      %p160 = scmp.ne.s32.totalorder %s149, %s152
      %p161 = scmp.eq.s32.totalorder %s24, 1
      %p162 = por %p160, %p161
      %p163 = scmp.ne.s32.totalorder %s152, %s153
      %p164 = scmp.eq.s32.totalorder %s24, 0
      %p165 = por %p163, %p164
      %p166 = scmp.ne.s32.totalorder %s152, %s153
      %p167 = scmp.eq.s32.totalorder %s25, 1
      %p168 = por %p166, %p167
      %p170 = scmp.ne.s32.totalorder %s153, %s169
      %p171 = scmp.eq.s32.totalorder %s25, 0
      %p172 = por %p170, %p171
      %p173 = scmp.le.s32.totalorder 1, %s19
      %p174 = scmp.lt.s32.totalorder %s19, 3
      %p175 = pnand %p173, %p174
      %p176 = pneg %p175
      // Predicated region
      $region9: #{_fused_matmul.1} parent=5 // pred_check
        _
      $region10: #{_fused_matmul.1} parent=5 // pred_check_branch
        %178 = sbr.rel (%p175) target = $region12
      $region11: #{_fused_matmul.1} parent=5 // pred_region
        %s179 = ssub.s32 %s19, 1
        // Predicated region
        $region13: #{_fused_matmul.1} parent=11 // pred_check
          %p180 = pneg %p66
        $region14: #{_fused_matmul.1} parent=11 // pred_check_branch
          %182 = sbr.rel (%p180) target = $region16
        $region15: #{_fused_matmul.1} parent=11 // pred_region
          %s184 = ssub.s32 2048, 2048
          %185 = vsyncadd [#allocation6], %s184
          %s186 = sshll.u32 [#allocation5], 4
          %s187 = int_to_ptr.vmem [resolvable:$true] %s186
          %192 = dma.hbm_to_vmem [thread:$0]  %s1, 2048, %s187, [#allocation6], 64, 64, 4
        $region16: #{_fused_matmul.1} parent=11 // pred_fallthru
          _
        // Predicated region
        $region17: #{_fused_matmul.1} parent=11 // pred_check
          %p193 = pneg %p87
        $region18: #{_fused_matmul.1} parent=11 // pred_check_branch
          %195 = sbr.rel (%p193) target = $region20
        $region19: #{_fused_matmul.1} parent=11 // pred_region
          _
        $region20: #{_fused_matmul.1} parent=11 // pred_fallthru
          _
      $region12: #{_fused_matmul.1} parent=5 // pred_fallthru
        _
      %p196 = scmp.lt.s32.totalorder %s19, 2
      // Predicated region
      $region21: #{_fused_matmul.1} parent=5 // pred_check
        %p197 = pneg %p196
      $region22: #{_fused_matmul.1} parent=5 // pred_check_branch
        %199 = sbr.rel (%p197) target = $region24
      $region23: #{_fused_matmul.1} parent=5 // pred_region
        // Predicated region
        $region25: #{_fused_matmul.1} parent=23 // pred_check
          %p200 = pneg %p39
        $region26: #{_fused_matmul.1} parent=23 // pred_check_branch
          %202 = sbr.rel (%p200) target = $region28
        $region27: #{_fused_matmul.1} parent=23 // pred_region
          %s203 = sand.u32 %s29, 1
          %s204 = scalar_lea.sflag [#allocation3], %s203
          %s205 = sand.u32 %s29, 1
          %s206 = smul.addr %s205, 256
          %s207 = scalar_lea.vmem [#allocation2], %s206
          %s208 = smul.u32 32, %s19
          %s210 = ssub.s32 4096, 4096
          %211 = vsyncadd %s204, %s210
          %s212 = smul.addr %s208, 2
          %s213 = smul.addr %s212, 64
          %s214 = scalar_lea.hbm %s0, %s213
          %s215 = sshll.u32 %s207, 4
          %s216 = int_to_ptr.vmem [resolvable:$true] %s215
          %221 = dma.hbm_to_vmem [thread:$0]  %s214, 4096, %s216, %s204, 128, 128, 8
        $region28: #{_fused_matmul.1} parent=23 // pred_fallthru
          _
      $region24: #{_fused_matmul.1} parent=5 // pred_fallthru
        _
      %p222 = scmp.le.s32.totalorder 1, %s19
      %p223 = scmp.lt.s32.totalorder %s19, 3
      %p224 = pnand %p222, %p223
      %p225 = pneg %p224
      // Predicated region
      $region29: #{_fused_matmul.1} parent=5 // pred_check
        _
      $region30: #{_fused_matmul.1} parent=5 // pred_check_branch
        %227 = sbr.rel (%p224) target = $region32
      $region31: #{_fused_matmul.1} parent=5 // pred_region
        %s228 = ssub.s32 %s19, 1
        %s229 = sand.u32 %s32, 1
        %s230 = scalar_lea.sflag [#allocation3], %s229
        %s231 = sand.u32 %s32, 1
        %s232 = smul.addr %s231, 256
        %s233 = scalar_lea.vmem [#allocation2], %s232
        // Predicated region
        $region33: #{_fused_matmul.1} parent=31 // pred_check
          %p234 = pneg %p45
        $region34: #{_fused_matmul.1} parent=31 // pred_check_branch
          %236 = sbr.rel (%p234) target = $region36
        $region35: #{_fused_matmul.1} parent=31 // pred_region
          %237 = dma.done %s230, 4096
        $region36: #{_fused_matmul.1} parent=31 // pred_fallthru
          _
        // Predicated region
        $region37: #{_fused_matmul.1} parent=31 // pred_check
          %p238 = pneg %p66
        $region38: #{_fused_matmul.1} parent=31 // pred_check_branch
          %240 = sbr.rel (%p238) target = $region40
        $region39: #{_fused_matmul.1} parent=31 // pred_region
          %241 = dma.done [#allocation6], 2048
        $region40: #{_fused_matmul.1} parent=31 // pred_fallthru
          _
        %s242 = sand.u32 %s32, 1
        %s243 = scalar_lea.sflag [#allocation3], %s242
        %s244 = sand.u32 %s32, 1
        %s245 = smul.addr %s244, 256
        %s246 = scalar_lea.vmem [#allocation2], %s245
        %p247 = pneg %p45
        %p248 = pneg %p42
        %p249 = pneg %p66
        %p250 = pneg %p63
        %p251 = pneg %p87
        %p252 = pneg %p84
        %p253 = pneg %p113
        %p254 = pneg %p110
        %s255 = sand.u32 %s100, 1
        %s256 = scalar_lea.sflag [#allocation4], %s255
        %s257 = sand.u32 %s100, 1
        %s258 = smul.addr %s257, 128
        %s259 = scalar_lea.vmem [#allocation7], %s258
        %p260 = pneg %p139
        %p261 = pneg %p136
        %p262 = scmp.lt.s32.totalorder %s24, 1
        %s263 = scalar_select %p262, %s24, 1
        %s264 = scalar_lea.vmem %s4, %s263
        %p265 = pneg %p165
        %p266 = pneg %p162
        %p267 = scmp.lt.s32.totalorder %s24, 1
        %s268 = scalar_select %p267, %s24, 1
        %s269 = scalar_lea.vmem %s5, %s268
        %s270 = smul.u32 32, %s24
        %s271 = smul.u32 32, %s24
        %p272 = scmp.lt.s32.totalorder %s24, 1
        %s273 = scalar_select %p272, %s24, 1
        %s274 = scalar_lea.vmem %s4, %s273
        %p275 = scmp.lt.s32.totalorder %s24, 1
        %s276 = scalar_select %p275, %s24, 1
        %s277 = scalar_lea.vmem %s5, %s276
        %v279 = vld [vmem:[%s233] sm:$0xff]
        %v280 = vld [vmem:[%s233 + $0x8] sm:$0xff]
        %v281 = vld [vmem:[%s233 + $0x10] sm:$0xff]
        %v282 = vld [vmem:[%s233 + $0x18] sm:$0xff]
        %v283 = vld [vmem:[%s233 + $0x20] sm:$0xff]
        %v284 = vld [vmem:[%s233 + $0x28] sm:$0xff]
        %v285 = vld [vmem:[%s233 + $0x30] sm:$0xff]
        %v286 = vld [vmem:[%s233 + $0x38] sm:$0xff]
        %v287 = vld [vmem:[%s233 + $0x40] sm:$0xff]
        %v288 = vld [vmem:[%s233 + $0x48] sm:$0xff]
        %v289 = vld [vmem:[%s233 + $0x50] sm:$0xff]
        %v290 = vld [vmem:[%s233 + $0x58] sm:$0xff]
        %v291 = vld [vmem:[%s233 + $0x60] sm:$0xff]
        %v292 = vld [vmem:[%s233 + $0x68] sm:$0xff]
        %v293 = vld [vmem:[%s233 + $0x70] sm:$0xff]
        %v294 = vld [vmem:[%s233 + $0x78] sm:$0xff]
        %v295 = vld [vmem:[%s233 + $0x80] sm:$0xff]
        %v296 = vld [vmem:[%s233 + $0x88] sm:$0xff]
        %v297 = vld [vmem:[%s233 + $0x90] sm:$0xff]
        %v298 = vld [vmem:[%s233 + $0x98] sm:$0xff]
        %v299 = vld [vmem:[%s233 + $0xa0] sm:$0xff]
        %v300 = vld [vmem:[%s233 + $0xa8] sm:$0xff]
        %v301 = vld [vmem:[%s233 + $0xb0] sm:$0xff]
        %v302 = vld [vmem:[%s233 + $0xb8] sm:$0xff]
        %v303 = vld [vmem:[%s233 + $0xc0] sm:$0xff]
        %v304 = vld [vmem:[%s233 + $0xc8] sm:$0xff]
        %v305 = vld [vmem:[%s233 + $0xd0] sm:$0xff]
        %v306 = vld [vmem:[%s233 + $0xd8] sm:$0xff]
        %v307 = vld [vmem:[%s233 + $0xe0] sm:$0xff]
        %v308 = vld [vmem:[%s233 + $0xe8] sm:$0xff]
        %v309 = vld [vmem:[%s233 + $0xf0] sm:$0xff]
        %v310 = vld [vmem:[%s233 + $0xf8] sm:$0xff]
        %v311 = vld [vmem:[#allocation5] sm:$0xf]
        %v312 = vld [vmem:[#allocation5 + $0x4] sm:$0xf]
        %v313 = vld [vmem:[#allocation5 + $0x8] sm:$0xf]
        %v314 = vld [vmem:[#allocation5 + $0xc] sm:$0xf]
        %v315 = vld [vmem:[#allocation5 + $0x10] sm:$0xf]
        %v316 = vld [vmem:[#allocation5 + $0x14] sm:$0xf]
        %v317 = vld [vmem:[#allocation5 + $0x18] sm:$0xf]
        %v318 = vld [vmem:[#allocation5 + $0x1c] sm:$0xf]
        %v319 = vld [vmem:[#allocation5 + $0x20] sm:$0xf]
        %v320 = vld [vmem:[#allocation5 + $0x24] sm:$0xf]
        %v321 = vld [vmem:[#allocation5 + $0x28] sm:$0xf]
        %v322 = vld [vmem:[#allocation5 + $0x2c] sm:$0xf]
        %v323 = vld [vmem:[#allocation5 + $0x30] sm:$0xf]
        %v324 = vld [vmem:[#allocation5 + $0x34] sm:$0xf]
        %v325 = vld [vmem:[#allocation5 + $0x38] sm:$0xf]
        %v326 = vld [vmem:[#allocation5 + $0x3c] sm:$0xf]
        %v327 = vld [vmem:[#allocation5 + $0x40] sm:$0xf]
        %v328 = vld [vmem:[#allocation5 + $0x44] sm:$0xf]
        %v329 = vld [vmem:[#allocation5 + $0x48] sm:$0xf]
        %v330 = vld [vmem:[#allocation5 + $0x4c] sm:$0xf]
        %v331 = vld [vmem:[#allocation5 + $0x50] sm:$0xf]
        %v332 = vld [vmem:[#allocation5 + $0x54] sm:$0xf]
        %v333 = vld [vmem:[#allocation5 + $0x58] sm:$0xf]
        %v334 = vld [vmem:[#allocation5 + $0x5c] sm:$0xf]
        %v335 = vld [vmem:[#allocation5 + $0x60] sm:$0xf]
        %v336 = vld [vmem:[#allocation5 + $0x64] sm:$0xf]
        %v337 = vld [vmem:[#allocation5 + $0x68] sm:$0xf]
        %v338 = vld [vmem:[#allocation5 + $0x6c] sm:$0xf]
        %v339 = vld [vmem:[#allocation5 + $0x70] sm:$0xf]
        %v340 = vld [vmem:[#allocation5 + $0x74] sm:$0xf]
        %v341 = vld [vmem:[#allocation5 + $0x78] sm:$0xf]
        %v342 = vld [vmem:[#allocation5 + $0x7c] sm:$0xf]
        %v343 = vld [vmem:[%s2] sm:$0x1]
        %v345 = vlaneseq
        %v346 = vshrl.u32 %v345, 7
        %v347 = vsub.s32 0, %v346
        %v348 = vrot.slane %v343, %v347
        %v382 = vunpack.c.l.b16 %v279
        %v383 = vunpack.c.h.b16 %v279
        %v384 = vunpack.c.l.b16 %v280
        %v385 = vunpack.c.h.b16 %v280
        %v386 = vunpack.c.l.b16 %v281
        %v387 = vunpack.c.h.b16 %v281
        %v388 = vunpack.c.l.b16 %v282
        %v389 = vunpack.c.h.b16 %v282
        %v390 = vunpack.c.l.b16 %v283
        %v391 = vunpack.c.h.b16 %v283
        %v392 = vunpack.c.l.b16 %v284
        %v393 = vunpack.c.h.b16 %v284
        %v394 = vunpack.c.l.b16 %v285
        %v395 = vunpack.c.h.b16 %v285
        %v396 = vunpack.c.l.b16 %v286
        %v397 = vunpack.c.h.b16 %v286
        %v398 = vunpack.c.l.b16 %v287
        %v399 = vunpack.c.h.b16 %v287
        %v400 = vunpack.c.l.b16 %v288
        %v401 = vunpack.c.h.b16 %v288
        %v402 = vunpack.c.l.b16 %v289
        %v403 = vunpack.c.h.b16 %v289
        %v404 = vunpack.c.l.b16 %v290
        %v405 = vunpack.c.h.b16 %v290
        %v406 = vunpack.c.l.b16 %v291
        %v407 = vunpack.c.h.b16 %v291
        %v408 = vunpack.c.l.b16 %v292
        %v409 = vunpack.c.h.b16 %v292
        %v410 = vunpack.c.l.b16 %v293
        %v411 = vunpack.c.h.b16 %v293
        %v412 = vunpack.c.l.b16 %v294
        %v413 = vunpack.c.h.b16 %v294
        %v414 = vunpack.c.l.b16 %v295
        %v415 = vunpack.c.h.b16 %v295
        %v416 = vunpack.c.l.b16 %v296
        %v417 = vunpack.c.h.b16 %v296
        %v418 = vunpack.c.l.b16 %v297
        %v419 = vunpack.c.h.b16 %v297
        %v420 = vunpack.c.l.b16 %v298
        %v421 = vunpack.c.h.b16 %v298
        %v422 = vunpack.c.l.b16 %v299
        %v423 = vunpack.c.h.b16 %v299
        %v424 = vunpack.c.l.b16 %v300
        %v425 = vunpack.c.h.b16 %v300
        %v426 = vunpack.c.l.b16 %v301
        %v427 = vunpack.c.h.b16 %v301
        %v428 = vunpack.c.l.b16 %v302
        %v429 = vunpack.c.h.b16 %v302
        %v430 = vunpack.c.l.b16 %v303
        %v431 = vunpack.c.h.b16 %v303
        %v432 = vunpack.c.l.b16 %v304
        %v433 = vunpack.c.h.b16 %v304
        %v434 = vunpack.c.l.b16 %v305
        %v435 = vunpack.c.h.b16 %v305
        %v436 = vunpack.c.l.b16 %v306
        %v437 = vunpack.c.h.b16 %v306
        %v438 = vunpack.c.l.b16 %v307
        %v439 = vunpack.c.h.b16 %v307
        %v440 = vunpack.c.l.b16 %v308
        %v441 = vunpack.c.h.b16 %v308
        %v442 = vunpack.c.l.b16 %v309
        %v443 = vunpack.c.h.b16 %v309
        %v444 = vunpack.c.l.b16 %v310
        %v445 = vunpack.c.h.b16 %v310
        %v446 = vpack.c.b16 %v384, %v382
        %v447 = vpack.c.b16 %v385, %v383
        %v448 = vpack.c.b16 %v388, %v386
        %v449 = vpack.c.b16 %v389, %v387
        %v450 = vpack.c.b16 %v392, %v390
        %v451 = vpack.c.b16 %v393, %v391
        %v452 = vpack.c.b16 %v396, %v394
        %v453 = vpack.c.b16 %v397, %v395
        %v454 = vpack.c.b16 %v400, %v398
        %v455 = vpack.c.b16 %v401, %v399
        %v456 = vpack.c.b16 %v404, %v402
        %v457 = vpack.c.b16 %v405, %v403
        %v458 = vpack.c.b16 %v408, %v406
        %v459 = vpack.c.b16 %v409, %v407
        %v460 = vpack.c.b16 %v412, %v410
        %v461 = vpack.c.b16 %v413, %v411
        %v462 = vpack.c.b16 %v416, %v414
        %v463 = vpack.c.b16 %v417, %v415
        %v464 = vpack.c.b16 %v420, %v418
        %v465 = vpack.c.b16 %v421, %v419
        %v466 = vpack.c.b16 %v424, %v422
        %v467 = vpack.c.b16 %v425, %v423
        %v468 = vpack.c.b16 %v428, %v426
        %v469 = vpack.c.b16 %v429, %v427
        %v470 = vpack.c.b16 %v432, %v430
        %v471 = vpack.c.b16 %v433, %v431
        %v472 = vpack.c.b16 %v436, %v434
        %v473 = vpack.c.b16 %v437, %v435
        %v474 = vpack.c.b16 %v440, %v438
        %v475 = vpack.c.b16 %v441, %v439
        %v476 = vpack.c.b16 %v444, %v442
        %v477 = vpack.c.b16 %v445, %v443
        %v542 = vunpack.c.l.b16 %v311
        %v543 = vunpack.c.l.b16 %v312
        %v544 = vunpack.c.l.b16 %v313
        %v545 = vunpack.c.l.b16 %v314
        %v546 = vunpack.c.l.b16 %v315
        %v547 = vunpack.c.l.b16 %v316
        %v548 = vunpack.c.l.b16 %v317
        %v549 = vunpack.c.l.b16 %v318
        %v550 = vunpack.c.l.b16 %v319
        %v551 = vunpack.c.l.b16 %v320
        %v552 = vunpack.c.l.b16 %v321
        %v553 = vunpack.c.l.b16 %v322
        %v554 = vunpack.c.l.b16 %v323
        %v555 = vunpack.c.l.b16 %v324
        %v556 = vunpack.c.l.b16 %v325
        %v557 = vunpack.c.l.b16 %v326
        %v558 = vunpack.c.l.b16 %v327
        %v559 = vunpack.c.l.b16 %v328
        %v560 = vunpack.c.l.b16 %v329
        %v561 = vunpack.c.l.b16 %v330
        %v562 = vunpack.c.l.b16 %v331
        %v563 = vunpack.c.l.b16 %v332
        %v564 = vunpack.c.l.b16 %v333
        %v565 = vunpack.c.l.b16 %v334
        %v566 = vunpack.c.l.b16 %v335
        %v567 = vunpack.c.l.b16 %v336
        %v568 = vunpack.c.l.b16 %v337
        %v569 = vunpack.c.l.b16 %v338
        %v570 = vunpack.c.l.b16 %v339
        %v571 = vunpack.c.l.b16 %v340
        %v572 = vunpack.c.l.b16 %v341
        %v573 = vunpack.c.l.b16 %v342
        %v574 = vpack.c.b16 %v543, %v542
        %v575 = vpack.c.b16 %v545, %v544
        %v576 = vpack.c.b16 %v547, %v546
        %v577 = vpack.c.b16 %v549, %v548
        %v578 = vpack.c.b16 %v551, %v550
        %v579 = vpack.c.b16 %v553, %v552
        %v580 = vpack.c.b16 %v555, %v554
        %v581 = vpack.c.b16 %v557, %v556
        %v582 = vpack.c.b16 %v559, %v558
        %v583 = vpack.c.b16 %v561, %v560
        %v584 = vpack.c.b16 %v563, %v562
        %v585 = vpack.c.b16 %v565, %v564
        %v586 = vpack.c.b16 %v567, %v566
        %v587 = vpack.c.b16 %v569, %v568
        %v588 = vpack.c.b16 %v571, %v570
        %v589 = vpack.c.b16 %v573, %v572
        %606 = vmatprep.subr.bf16.mxu0 0
        %607 = vmatpush1.bf16.msra.mxu0 %v581
        %608 = vmatprep.subr.bf16.mxu0 0
        %609 = vmatpush1.bf16.msra.mxu0 %v580
        %610 = vmatprep.subr.bf16.mxu0 0
        %611 = vmatpush1.bf16.msra.mxu0 %v579
        %612 = vmatprep.subr.bf16.mxu0 0
        %613 = vmatpush1.bf16.msra.mxu0 %v578
        %614 = vmatprep.subr.bf16.mxu0 0
        %615 = vmatpush1.bf16.msra.mxu0 %v577
        %616 = vmatprep.subr.bf16.mxu0 0
        %617 = vmatpush1.bf16.msra.mxu0 %v576
        %618 = vmatprep.subr.bf16.mxu0 0
        %619 = vmatpush1.bf16.msra.mxu0 %v575
        %620 = vmatprep.subr.bf16.mxu0 0
        %621 = vmatpush1.bf16.msra.mxu0 %v574
        %622 = vmatprep.subr.bf16.mxu0 0
        %623 = vmatpush2.bf16.msra.mxu0 %v589
        %624 = vmatprep.subr.bf16.mxu0 0
        %625 = vmatpush2.bf16.msra.mxu0 %v588
        %626 = vmatprep.subr.bf16.mxu0 0
        %627 = vmatpush2.bf16.msra.mxu0 %v587
        %628 = vmatprep.subr.bf16.mxu0 0
        %629 = vmatpush2.bf16.msra.mxu0 %v586
        %630 = vmatprep.subr.bf16.mxu0 0
        %631 = vmatpush2.bf16.msra.mxu0 %v585
        %632 = vmatprep.subr.bf16.mxu0 0
        %633 = vmatpush2.bf16.msra.mxu0 %v584
        %634 = vmatprep.subr.bf16.mxu0 0
        %635 = vmatpush2.bf16.msra.mxu0 %v583
        %636 = vmatprep.subr.bf16.mxu0 0
        %637 = vmatpush2.bf16.msra.mxu0 %v582
        %638 = vmatprep.mubr.bf16.mxu0 %v447
        %639 = vmatmul.mubr.bf16.gmra.mxu0 %v446
        %v640 = vpop.f32.mrf.mxu0
        %v641 = vadd.f32 %v348, %v640
        %v642 = vpop.f32.mrf.mxu0
        %v643 = vpop.f32.mrf.mxu0
        %v644 = vadd.f32 %v348, %v643
        %v645 = vpop.f32.mrf.mxu0
        %646 = vmatprep.mubr.bf16.mxu0 %v449
        %647 = vmatmul.mubr.bf16.gmra.mxu0 %v448
        %v648 = vpop.f32.mrf.mxu0
        %v649 = vadd.f32 %v348, %v648
        %v650 = vpop.f32.mrf.mxu0
        %v651 = vpop.f32.mrf.mxu0
        %v652 = vadd.f32 %v348, %v651
        %v653 = vpop.f32.mrf.mxu0
        %654 = vmatprep.mubr.bf16.mxu0 %v451
        %655 = vmatmul.mubr.bf16.gmra.mxu0 %v450
        %v656 = vpop.f32.mrf.mxu0
        %v657 = vadd.f32 %v348, %v656
        %v658 = vpop.f32.mrf.mxu0
        %v659 = vpop.f32.mrf.mxu0
        %v660 = vadd.f32 %v348, %v659
        %v661 = vpop.f32.mrf.mxu0
        %662 = vmatprep.mubr.bf16.mxu0 %v453
        %663 = vmatmul.mubr.bf16.gmra.mxu0 %v452
        %v664 = vpop.f32.mrf.mxu0
        %v665 = vadd.f32 %v348, %v664
        %v666 = vpop.f32.mrf.mxu0
        %v667 = vpop.f32.mrf.mxu0
        %v668 = vadd.f32 %v348, %v667
        %v669 = vpop.f32.mrf.mxu0
        %670 = vmatprep.mubr.bf16.mxu0 %v455
        %671 = vmatmul.mubr.bf16.gmra.mxu0 %v454
        %v672 = vpop.f32.mrf.mxu0
        %v673 = vadd.f32 %v348, %v672
        %v674 = vpop.f32.mrf.mxu0
        %v675 = vpop.f32.mrf.mxu0
        %v676 = vadd.f32 %v348, %v675
        %v677 = vpop.f32.mrf.mxu0
        %678 = vmatprep.mubr.bf16.mxu0 %v457
        %679 = vmatmul.mubr.bf16.gmra.mxu0 %v456
        %v680 = vpop.f32.mrf.mxu0
        %v681 = vadd.f32 %v348, %v680
        %v682 = vpop.f32.mrf.mxu0
        %v683 = vpop.f32.mrf.mxu0
        %v684 = vadd.f32 %v348, %v683
        %v685 = vpop.f32.mrf.mxu0
        %686 = vmatprep.mubr.bf16.mxu0 %v459
        %687 = vmatmul.mubr.bf16.gmra.mxu0 %v458
        %v688 = vpop.f32.mrf.mxu0
        %v689 = vadd.f32 %v348, %v688
        %v690 = vpop.f32.mrf.mxu0
        %v691 = vpop.f32.mrf.mxu0
        %v692 = vadd.f32 %v348, %v691
        %v693 = vpop.f32.mrf.mxu0
        %694 = vmatprep.mubr.bf16.mxu0 %v461
        %695 = vmatmul.mubr.bf16.gmra.mxu0 %v460
        %v696 = vpop.f32.mrf.mxu0
        %v697 = vadd.f32 %v348, %v696
        %v698 = vpop.f32.mrf.mxu0
        %v699 = vpop.f32.mrf.mxu0
        %v700 = vadd.f32 %v348, %v699
        %v701 = vpop.f32.mrf.mxu0
        %702 = vmatprep.mubr.bf16.mxu0 %v463
        %703 = vmatmul.mubr.bf16.gmra.mxu0 %v462
        %v704 = vpop.f32.mrf.mxu0
        %v705 = vadd.f32 %v348, %v704
        %v706 = vpop.f32.mrf.mxu0
        %v707 = vpop.f32.mrf.mxu0
        %v708 = vadd.f32 %v348, %v707
        %v709 = vpop.f32.mrf.mxu0
        %710 = vmatprep.mubr.bf16.mxu0 %v465
        %711 = vmatmul.mubr.bf16.gmra.mxu0 %v464
        %v712 = vpop.f32.mrf.mxu0
        %v713 = vadd.f32 %v348, %v712
        %v714 = vpop.f32.mrf.mxu0
        %v715 = vpop.f32.mrf.mxu0
        %v716 = vadd.f32 %v348, %v715
        %v717 = vpop.f32.mrf.mxu0
        %718 = vmatprep.mubr.bf16.mxu0 %v467
        %719 = vmatmul.mubr.bf16.gmra.mxu0 %v466
        %v720 = vpop.f32.mrf.mxu0
        %v721 = vadd.f32 %v348, %v720
        %v722 = vpop.f32.mrf.mxu0
        %v723 = vpop.f32.mrf.mxu0
        %v724 = vadd.f32 %v348, %v723
        %v725 = vpop.f32.mrf.mxu0
        %726 = vmatprep.mubr.bf16.mxu0 %v469
        %727 = vmatmul.mubr.bf16.gmra.mxu0 %v468
        %v728 = vpop.f32.mrf.mxu0
        %v729 = vadd.f32 %v348, %v728
        %v730 = vpop.f32.mrf.mxu0
        %v731 = vpop.f32.mrf.mxu0
        %v732 = vadd.f32 %v348, %v731
        %v733 = vpop.f32.mrf.mxu0
        %734 = vmatprep.mubr.bf16.mxu0 %v471
        %735 = vmatmul.mubr.bf16.gmra.mxu0 %v470
        %v736 = vpop.f32.mrf.mxu0
        %v737 = vadd.f32 %v348, %v736
        %v738 = vpop.f32.mrf.mxu0
        %v739 = vpop.f32.mrf.mxu0
        %v740 = vadd.f32 %v348, %v739
        %v741 = vpop.f32.mrf.mxu0
        %742 = vmatprep.mubr.bf16.mxu0 %v473
        %743 = vmatmul.mubr.bf16.gmra.mxu0 %v472
        %v744 = vpop.f32.mrf.mxu0
        %v745 = vadd.f32 %v348, %v744
        %v746 = vpop.f32.mrf.mxu0
        %v747 = vpop.f32.mrf.mxu0
        %v748 = vadd.f32 %v348, %v747
        %v749 = vpop.f32.mrf.mxu0
        %750 = vmatprep.mubr.bf16.mxu0 %v475
        %751 = vmatmul.mubr.bf16.gmra.mxu0 %v474
        %v752 = vpop.f32.mrf.mxu0
        %v753 = vadd.f32 %v348, %v752
        %v754 = vpop.f32.mrf.mxu0
        %v755 = vpop.f32.mrf.mxu0
        %v756 = vadd.f32 %v348, %v755
        %v757 = vpop.f32.mrf.mxu0
        %758 = vmatprep.mubr.bf16.mxu0 %v477
        %759 = vmatmul.mubr.bf16.gmra.mxu0 %v476
        %v760 = vpop.f32.mrf.mxu0
        %v761 = vadd.f32 %v348, %v760
        %v762 = vpop.f32.mrf.mxu0
        %v763 = vpop.f32.mrf.mxu0
        %v764 = vadd.f32 %v348, %v763
        %v765 = vpop.f32.mrf.mxu0
        %766 = vdwg.mxu0
        %v767 = vpack.c.bf16 %v644, %v641
        %v768 = vpack.c.bf16 %v652, %v649
        %v769 = vpack.c.bf16 %v660, %v657
        %v770 = vpack.c.bf16 %v668, %v665
        %v771 = vpack.c.bf16 %v676, %v673
        %v772 = vpack.c.bf16 %v684, %v681
        %v773 = vpack.c.bf16 %v692, %v689
        %v774 = vpack.c.bf16 %v700, %v697
        %v775 = vpack.c.bf16 %v708, %v705
        %v776 = vpack.c.bf16 %v716, %v713
        %v777 = vpack.c.bf16 %v724, %v721
        %v778 = vpack.c.bf16 %v732, %v729
        %v779 = vpack.c.bf16 %v740, %v737
        %v780 = vpack.c.bf16 %v748, %v745
        %v781 = vpack.c.bf16 %v756, %v753
        %v782 = vpack.c.bf16 %v764, %v761
        %v799 = vunpack.c.l.b16 %v767
        %v800 = vunpack.c.h.b16 %v767
        %v801 = vunpack.c.l.b16 %v768
        %v802 = vunpack.c.h.b16 %v768
        %v803 = vunpack.c.l.b16 %v769
        %v804 = vunpack.c.h.b16 %v769
        %v805 = vunpack.c.l.b16 %v770
        %v806 = vunpack.c.h.b16 %v770
        %v807 = vunpack.c.l.b16 %v771
        %v808 = vunpack.c.h.b16 %v771
        %v809 = vunpack.c.l.b16 %v772
        %v810 = vunpack.c.h.b16 %v772
        %v811 = vunpack.c.l.b16 %v773
        %v812 = vunpack.c.h.b16 %v773
        %v813 = vunpack.c.l.b16 %v774
        %v814 = vunpack.c.h.b16 %v774
        %v815 = vunpack.c.l.b16 %v775
        %v816 = vunpack.c.h.b16 %v775
        %v817 = vunpack.c.l.b16 %v776
        %v818 = vunpack.c.h.b16 %v776
        %v819 = vunpack.c.l.b16 %v777
        %v820 = vunpack.c.h.b16 %v777
        %v821 = vunpack.c.l.b16 %v778
        %v822 = vunpack.c.h.b16 %v778
        %v823 = vunpack.c.l.b16 %v779
        %v824 = vunpack.c.h.b16 %v779
        %v825 = vunpack.c.l.b16 %v780
        %v826 = vunpack.c.h.b16 %v780
        %v827 = vunpack.c.l.b16 %v781
        %v828 = vunpack.c.h.b16 %v781
        %v829 = vunpack.c.l.b16 %v782
        %v830 = vunpack.c.h.b16 %v782
        %v831 = vpack.c.b16 %v799, %v799
        %v832 = vpack.c.b16 %v800, %v800
        %v833 = vpack.c.b16 %v801, %v801
        %v834 = vpack.c.b16 %v802, %v802
        %v835 = vpack.c.b16 %v803, %v803
        %v836 = vpack.c.b16 %v804, %v804
        %v837 = vpack.c.b16 %v805, %v805
        %v838 = vpack.c.b16 %v806, %v806
        %v839 = vpack.c.b16 %v807, %v807
        %v840 = vpack.c.b16 %v808, %v808
        %v841 = vpack.c.b16 %v809, %v809
        %v842 = vpack.c.b16 %v810, %v810
        %v843 = vpack.c.b16 %v811, %v811
        %v844 = vpack.c.b16 %v812, %v812
        %v845 = vpack.c.b16 %v813, %v813
        %v846 = vpack.c.b16 %v814, %v814
        %v847 = vpack.c.b16 %v815, %v815
        %v848 = vpack.c.b16 %v816, %v816
        %v849 = vpack.c.b16 %v817, %v817
        %v850 = vpack.c.b16 %v818, %v818
        %v851 = vpack.c.b16 %v819, %v819
        %v852 = vpack.c.b16 %v820, %v820
        %v853 = vpack.c.b16 %v821, %v821
        %v854 = vpack.c.b16 %v822, %v822
        %v855 = vpack.c.b16 %v823, %v823
        %v856 = vpack.c.b16 %v824, %v824
        %v857 = vpack.c.b16 %v825, %v825
        %v858 = vpack.c.b16 %v826, %v826
        %v859 = vpack.c.b16 %v827, %v827
        %v860 = vpack.c.b16 %v828, %v828
        %v861 = vpack.c.b16 %v829, %v829
        %v862 = vpack.c.b16 %v830, %v830
        %895 = vst [vmem:[%s259] sm:$0xf] %v831
        %896 = vst [vmem:[%s259 + $0x4] sm:$0xf] %v832
        %897 = vst [vmem:[%s259 + $0x8] sm:$0xf] %v833
        %898 = vst [vmem:[%s259 + $0xc] sm:$0xf] %v834
        %899 = vst [vmem:[%s259 + $0x10] sm:$0xf] %v835
        %900 = vst [vmem:[%s259 + $0x14] sm:$0xf] %v836
        %901 = vst [vmem:[%s259 + $0x18] sm:$0xf] %v837
        %902 = vst [vmem:[%s259 + $0x1c] sm:$0xf] %v838
        %903 = vst [vmem:[%s259 + $0x20] sm:$0xf] %v839
        %904 = vst [vmem:[%s259 + $0x24] sm:$0xf] %v840
        %905 = vst [vmem:[%s259 + $0x28] sm:$0xf] %v841
        %906 = vst [vmem:[%s259 + $0x2c] sm:$0xf] %v842
        %907 = vst [vmem:[%s259 + $0x30] sm:$0xf] %v843
        %908 = vst [vmem:[%s259 + $0x34] sm:$0xf] %v844
        %909 = vst [vmem:[%s259 + $0x38] sm:$0xf] %v845
        %910 = vst [vmem:[%s259 + $0x3c] sm:$0xf] %v846
        %911 = vst [vmem:[%s259 + $0x40] sm:$0xf] %v847
        %912 = vst [vmem:[%s259 + $0x44] sm:$0xf] %v848
        %913 = vst [vmem:[%s259 + $0x48] sm:$0xf] %v849
        %914 = vst [vmem:[%s259 + $0x4c] sm:$0xf] %v850
        %915 = vst [vmem:[%s259 + $0x50] sm:$0xf] %v851
        %916 = vst [vmem:[%s259 + $0x54] sm:$0xf] %v852
        %917 = vst [vmem:[%s259 + $0x58] sm:$0xf] %v853
        %918 = vst [vmem:[%s259 + $0x5c] sm:$0xf] %v854
        %919 = vst [vmem:[%s259 + $0x60] sm:$0xf] %v855
        %920 = vst [vmem:[%s259 + $0x64] sm:$0xf] %v856
        %921 = vst [vmem:[%s259 + $0x68] sm:$0xf] %v857
        %922 = vst [vmem:[%s259 + $0x6c] sm:$0xf] %v858
        %923 = vst [vmem:[%s259 + $0x70] sm:$0xf] %v859
        %924 = vst [vmem:[%s259 + $0x74] sm:$0xf] %v860
        %925 = vst [vmem:[%s259 + $0x78] sm:$0xf] %v861
        %926 = vst [vmem:[%s259 + $0x7c] sm:$0xf] %v862
        %v927 = vadd.f32 %v641, %v644
        %v928 = vadd.f32 %v927, %v649
        %v929 = vadd.f32 %v928, %v652
        %v930 = vadd.f32 %v929, %v657
        %v931 = vadd.f32 %v930, %v660
        %v932 = vadd.f32 %v931, %v665
        %v933 = vadd.f32 %v932, %v668
        %v934 = vadd.f32 %v933, %v673
        %v935 = vadd.f32 %v934, %v676
        %v936 = vadd.f32 %v935, %v681
        %v937 = vadd.f32 %v936, %v684
        %v938 = vadd.f32 %v937, %v689
        %v939 = vadd.f32 %v938, %v692
        %v940 = vadd.f32 %v939, %v697
        %v941 = vadd.f32 %v940, %v700
        %v942 = vadd.f32 %v941, %v705
        %v943 = vadd.f32 %v942, %v708
        %v944 = vadd.f32 %v943, %v713
        %v945 = vadd.f32 %v944, %v716
        %v946 = vadd.f32 %v945, %v721
        %v947 = vadd.f32 %v946, %v724
        %v948 = vadd.f32 %v947, %v729
        %v949 = vadd.f32 %v948, %v732
        %v950 = vadd.f32 %v949, %v737
        %v951 = vadd.f32 %v950, %v740
        %v952 = vadd.f32 %v951, %v745
        %v953 = vadd.f32 %v952, %v748
        %v954 = vadd.f32 %v953, %v753
        %v955 = vadd.f32 %v954, %v756
        %v956 = vadd.f32 %v955, %v761
        %v957 = vadd.f32 %v956, %v764
        %v958 = vrot.slane %v957, 4
        %v959 = vadd.f32 %v957, %v958
        %v960 = vrot.slane %v959, 2
        %v961 = vadd.f32 %v959, %v960
        %v962 = vrot.slane %v961, 1
        %v963 = vadd.f32 %v961, %v962
        %964 = vst [vmem:[%s274] sm:$0x1] %v963
        %v965 = vmul.f32 %v641, %v641
        %v966 = vmul.f32 %v644, %v644
        %v967 = vmul.f32 %v649, %v649
        %v968 = vmul.f32 %v652, %v652
        %v969 = vmul.f32 %v657, %v657
        %v970 = vmul.f32 %v660, %v660
        %v971 = vmul.f32 %v665, %v665
        %v972 = vmul.f32 %v668, %v668
        %v973 = vmul.f32 %v673, %v673
        %v974 = vmul.f32 %v676, %v676
        %v975 = vmul.f32 %v681, %v681
        %v976 = vmul.f32 %v684, %v684
        %v977 = vmul.f32 %v689, %v689
        %v978 = vmul.f32 %v692, %v692
        %v979 = vmul.f32 %v697, %v697
        %v980 = vmul.f32 %v700, %v700
        %v981 = vmul.f32 %v705, %v705
        %v982 = vmul.f32 %v708, %v708
        %v983 = vmul.f32 %v713, %v713
        %v984 = vmul.f32 %v716, %v716
        %v985 = vmul.f32 %v721, %v721
        %v986 = vmul.f32 %v724, %v724
        %v987 = vmul.f32 %v729, %v729
        %v988 = vmul.f32 %v732, %v732
        %v989 = vmul.f32 %v737, %v737
        %v990 = vmul.f32 %v740, %v740
        %v991 = vmul.f32 %v745, %v745
        %v992 = vmul.f32 %v748, %v748
        %v993 = vmul.f32 %v753, %v753
        %v994 = vmul.f32 %v756, %v756
        %v995 = vmul.f32 %v761, %v761
        %v996 = vmul.f32 %v764, %v764
        %v997 = vadd.f32 %v965, %v966
        %v998 = vadd.f32 %v997, %v967
        %v999 = vadd.f32 %v998, %v968
        %v1000 = vadd.f32 %v999, %v969
        %v1001 = vadd.f32 %v1000, %v970
        %v1002 = vadd.f32 %v1001, %v971
        %v1003 = vadd.f32 %v1002, %v972
        %v1004 = vadd.f32 %v1003, %v973
        %v1005 = vadd.f32 %v1004, %v974
        %v1006 = vadd.f32 %v1005, %v975
        %v1007 = vadd.f32 %v1006, %v976
        %v1008 = vadd.f32 %v1007, %v977
        %v1009 = vadd.f32 %v1008, %v978
        %v1010 = vadd.f32 %v1009, %v979
        %v1011 = vadd.f32 %v1010, %v980
        %v1012 = vadd.f32 %v1011, %v981
        %v1013 = vadd.f32 %v1012, %v982
        %v1014 = vadd.f32 %v1013, %v983
        %v1015 = vadd.f32 %v1014, %v984
        %v1016 = vadd.f32 %v1015, %v985
        %v1017 = vadd.f32 %v1016, %v986
        %v1018 = vadd.f32 %v1017, %v987
        %v1019 = vadd.f32 %v1018, %v988
        %v1020 = vadd.f32 %v1019, %v989
        %v1021 = vadd.f32 %v1020, %v990
        %v1022 = vadd.f32 %v1021, %v991
        %v1023 = vadd.f32 %v1022, %v992
        %v1024 = vadd.f32 %v1023, %v993
        %v1025 = vadd.f32 %v1024, %v994
        %v1026 = vadd.f32 %v1025, %v995
        %v1027 = vadd.f32 %v1026, %v996
        %v1028 = vrot.slane %v1027, 4
        %v1029 = vadd.f32 %v1027, %v1028
        %v1030 = vrot.slane %v1029, 2
        %v1031 = vadd.f32 %v1029, %v1030
        %v1032 = vrot.slane %v1031, 1
        %v1033 = vadd.f32 %v1031, %v1032
        %1034 = vst [vmem:[%s277] sm:$0x1] %v1033
        %s1035 = sand.u32 %s100, 1
        %s1036 = scalar_lea.sflag [#allocation4], %s1035
        %s1037 = sand.u32 %s100, 1
        %s1038 = smul.addr %s1037, 128
        %s1039 = scalar_lea.vmem [#allocation7], %s1038
        %p1040 = scmp.lt.s32.totalorder %s24, 1
        %s1041 = scalar_select %p1040, %s24, 1
        %s1042 = scalar_lea.vmem %s4, %s1041
        %p1043 = scmp.lt.s32.totalorder %s24, 1
        %s1044 = scalar_select %p1043, %s24, 1
        %s1045 = scalar_lea.vmem %s5, %s1044
        // Predicated region
        $region41: #{_fused_matmul.1} parent=31 // pred_check
          %p1046 = pneg %p110
        $region42: #{_fused_matmul.1} parent=31 // pred_check_branch
          %1048 = sbr.rel (%p1046) target = $region44
        $region43: #{_fused_matmul.1} parent=31 // pred_region
          %s1049 = smul.u32 32, %s24
          %s1051 = ssub.s32 2048, 2048
          %1052 = vsyncadd %s1036, %s1051
          %s1053 = smul.addr %s1049, 64
          %s1054 = scalar_lea.hbm %s3, %s1053
          %s1055 = sshll.u32 %s1039, 4
          %s1056 = int_to_ptr.vmem [resolvable:$true] %s1055
          %1061 = dma.vmem_to_hbm [thread:$0]  %s1056, 2048, %s1054, %s1036, 64, 64, 4
        $region44: #{_fused_matmul.1} parent=31 // pred_fallthru
          _
        // Predicated region
        $region45: #{_fused_matmul.1} parent=31 // pred_check
          %p1062 = pneg %p136
        $region46: #{_fused_matmul.1} parent=31 // pred_check_branch
          %1064 = sbr.rel (%p1062) target = $region48
        $region47: #{_fused_matmul.1} parent=31 // pred_region
          _
        $region48: #{_fused_matmul.1} parent=31 // pred_fallthru
          _
        // Predicated region
        $region49: #{_fused_matmul.1} parent=31 // pred_check
          %p1065 = pneg %p162
        $region50: #{_fused_matmul.1} parent=31 // pred_check_branch
          %1067 = sbr.rel (%p1065) target = $region52
        $region51: #{_fused_matmul.1} parent=31 // pred_region
          _
        $region52: #{_fused_matmul.1} parent=31 // pred_fallthru
          _
      $region32: #{_fused_matmul.1} parent=5 // pred_fallthru
        _
      %p1068 = scmp.le.s32.totalorder 2, %s19
      // Predicated region
      $region53: #{_fused_matmul.1} parent=5 // pred_check
        %p1069 = pneg %p1068
      $region54: #{_fused_matmul.1} parent=5 // pred_check_branch
        %1071 = sbr.rel (%p1069) target = $region56
      $region55: #{_fused_matmul.1} parent=5 // pred_region
        %s1072 = ssub.s32 %s19, 2
        // Predicated region
        $region57: #{_fused_matmul.1} parent=55 // pred_check
          %p1073 = pneg %p116
        $region58: #{_fused_matmul.1} parent=55 // pred_check_branch
          %1075 = sbr.rel (%p1073) target = $region60
        $region59: #{_fused_matmul.1} parent=55 // pred_region
          %s1076 = sand.u32 %s101, 1
          %s1077 = scalar_lea.sflag [#allocation4], %s1076
          %s1078 = sand.u32 %s101, 1
          %s1079 = smul.addr %s1078, 128
          %s1080 = scalar_lea.vmem [#allocation7], %s1079
          %1081 = dma.done %s1077, 2048
        $region60: #{_fused_matmul.1} parent=55 // pred_fallthru
          _
        // Predicated region
        $region61: #{_fused_matmul.1} parent=55 // pred_check
          %p1082 = pneg %p142
        $region62: #{_fused_matmul.1} parent=55 // pred_check_branch
          %1084 = sbr.rel (%p1082) target = $region64
        $region63: #{_fused_matmul.1} parent=55 // pred_region
          %p1085 = scmp.lt.s32.totalorder %s25, 1
          %s1086 = scalar_select %p1085, %s25, 1
          %s1087 = scalar_lea.vmem %s4, %s1086
        $region64: #{_fused_matmul.1} parent=55 // pred_fallthru
          _
        // Predicated region
        $region65: #{_fused_matmul.1} parent=55 // pred_check
          %p1088 = pneg %p168
        $region66: #{_fused_matmul.1} parent=55 // pred_check_branch
          %1090 = sbr.rel (%p1088) target = $region68
        $region67: #{_fused_matmul.1} parent=55 // pred_region
          %p1091 = scmp.lt.s32.totalorder %s25, 1
          %s1092 = scalar_select %p1091, %s25, 1
          %s1093 = scalar_lea.vmem %s5, %s1092
        $region68: #{_fused_matmul.1} parent=55 // pred_fallthru
          _
      $region56: #{_fused_matmul.1} parent=5 // pred_fallthru
        _
    $region6: #{_fused_matmul.1} parent=1 // loop_footer
      %s23 = sadd.s32 1, %s19
    $region7: #{_fused_matmul.1} parent=1 // loop_footer_branch
      %18 = sbr.rel target = $region3
    $region8: #{_fused_matmul.1} parent=1 // loop_exit
      _
    %1094 = vsyncpa [#allocation3], 1
    %s1095 = scalar_lea.sflag [#allocation3], 1
    %1096 = vsyncpa %s1095, 1
    %1097 = vsyncpa [#allocation6], 1
    %1098 = vsyncpa [#allocation4], 1
    %s1099 = scalar_lea.sflag [#allocation4], 1
    %1100 = vsyncpa %s1099, 1

</llo_original>
